<compile_context>
chip_gen: v6e
topology: v6e:2x2x1
jax: 0.10.0
libtpu: 0.0.40
codegen_flags: <defaults>
</compile_context>

<pallas_src>
import functools

import jax
import jax.numpy as jnp
from jax.experimental import pallas as pl
from jax.experimental.pallas import tpu as pltpu


# ----------------------------- Pallas kernel ------------------------------- #

def _features_linear_kernel(idx_ref, w_ref, bias_ref, o_ref, *,
                            num_fields, vocab, out_dim):
    """One batch tile, transposed layout (batch on lanes).

    idx_ref:  (F, TB)  int32, offsets already added in the wrapper
    w_ref:    (V, 1)   native dtype  if out_dim == 1
              (D, V)   native dtype  if out_dim  > 1
    bias_ref: (D, 1)   f32
    o_ref:    (D, TB)  f32  (lane-dense store)
    """
    tb = idx_ref.shape[-1]
    idx = idx_ref[...]                                            # (F, TB)
    vocab_iota = jax.lax.broadcasted_iota(jnp.int32, (vocab, tb), 0)

    # Multi-hot counts, transposed: counts_t[v, b] = #{f : idx[b, f] == v}.
    # (1, TB) idx rows broadcast across sublanes (stride-0); f32 accumulate
    # (exact for counts, and v5e has no bf16 VPU).
    counts_t = jnp.zeros((vocab, tb), jnp.float32)
    for f in range(num_fields):              # small & static -> unrolled
        counts_t += (vocab_iota == idx[f:f + 1, :]).astype(jnp.float32)

    if out_dim == 1:
        # VPU multiply + sublane reduce; avoids a 1-wide MXU pass entirely.
        w = w_ref[...].astype(jnp.float32)                        # (V, 1)
        out_t = jnp.sum(counts_t * w, axis=0, keepdims=True)      # (1, TB)
    else:
        # (D, V) @ (V, TB): N = TB is lane-dense.  bf16 operands (counts are
        # exact small integers in bf16), f32 accumulation on the MXU.
        out_t = jnp.dot(w_ref[...].astype(jnp.bfloat16),
                        counts_t.astype(jnp.bfloat16),
                        preferred_element_type=jnp.float32)       # (D, TB)

    o_ref[...] = (out_t + bias_ref[...]).astype(o_ref.dtype)


# ------------------------------ Host wrapper ------------------------------- #

def _round_up(x, m):
    return (x + m - 1) // m * m


@functools.partial(jax.jit, static_argnames=("block_b",))
def features_linear(idx, offsets, table, bias, *, block_b=512):
    """Fused FeaturesLinear forward.

    idx:     (B, F) int   per-field local indices
    offsets: (F,)   int   field offsets
    table:   (V, D)       embedding table, V = sum(field_dims) (any float dtype)
    bias:    (D,)         bias
    returns  (B, D) f32
    """
    batch, num_fields = idx.shape
    vocab, out_dim = table.shape

    # Hoisted global indices (drops the per-tile add + offsets operand DMA),
    # transposed so the batch sits on the lane axis.
    idx_t = (idx.astype(jnp.int32) + offsets.astype(jnp.int32)[None, :]).T  # (F, B)

    # Batch tiling on the lane axis: multiples of 128; prefer >=2 grid steps
    # when the batch allows it so "parallel" can shard across v7x's 2 cores.
    block_b = max(128, _round_up(block_b, 128))
    b_pad = _round_up(batch, 128)
    tb = min(block_b, b_pad)
    if b_pad > 128 and b_pad // tb < 2:
        tb = max(128, _round_up(b_pad // 2, 128))
    b_pad = _round_up(batch, tb)
    if b_pad != batch:
        idx_t = jnp.pad(idx_t, ((0, 0), (0, b_pad - batch)))   # pad idx 0: in-range

    bias2 = bias.reshape(out_dim, 1).astype(jnp.float32)
    if out_dim == 1:
        w = table.reshape(vocab, 1)                  # native dtype, cast in kernel
        w_spec = pl.BlockSpec((vocab, 1), lambda i: (0, 0))
    else:
        w = table.T                                  # (D, V), native dtype
        w_spec = pl.BlockSpec((out_dim, vocab), lambda i: (0, 0))

    kernel = functools.partial(_features_linear_kernel, num_fields=num_fields,
                               vocab=vocab, out_dim=out_dim)

    out_t = pl.pallas_call(
        kernel,
        out_shape=jax.ShapeDtypeStruct((out_dim, b_pad), jnp.float32),
        grid_spec=pltpu.PrefetchScalarGridSpec(
            num_scalar_prefetch=0,
            grid=(b_pad // tb,),
            in_specs=[pl.BlockSpec((num_fields, tb), lambda i: (0, i)),
                      w_spec,
                      pl.BlockSpec((out_dim, 1), lambda i: (0, 0))],
            out_specs=pl.BlockSpec((out_dim, tb), lambda i: (0, i)),
        ),
        compiler_params=pltpu.CompilerParams(
            dimension_semantics=("parallel",)),
    )(idx_t, w, bias2)

    return out_t[:, :batch].T                         # (B, D) f32


# -------------------------------- Reference -------------------------------- #

def _reference(idx, offsets, table, bias):
    gathered = jnp.take(table, idx + offsets[None, :], axis=0)   # (B, F, D)
    return gathered.sum(axis=1) + bias[None, :]


# ---------------------------------- Main ----------------------------------- #

if __name__ == "__main__":
    key = jax.random.PRNGKey(0)

    field_dims = [3, 5, 6, 7]            # vocab = 21
    num_fields = len(field_dims)
    vocab = sum(field_dims)
    batch = 200                          # not a multiple of 128: exercises the
                                         # batch padding and a 2-step grid
    output_dim = 1

    # offsets = (0, cumsum(field_dims)[:-1])
    offs = [0]
    for d in field_dims[:-1]:
        offs.append(offs[-1] + d)
    offsets = jnp.asarray(offs, dtype=jnp.int32)

    # Per-field local indices in [0, field_dims[f])
    key, *field_keys = jax.random.split(key, num_fields + 1)
    idx = jnp.concatenate(
        [jax.random.randint(k, (batch, 1), 0, d, dtype=jnp.int32)
         for k, d in zip(field_keys, field_dims)], axis=1)

    key, kt, kb = jax.random.split(key, 3)
    table = 0.1 * jax.random.normal(kt, (vocab, output_dim), jnp.float32)
    bias = 0.1 * jax.random.normal(kb, (output_dim,), jnp.float32)

    # block_b=128 with batch=200 -> b_pad=256, 2 grid steps (pipelined, parallel).
    out = jax.block_until_ready(
        features_linear(idx, offsets, table, bias, block_b=128))
    ref = _reference(idx, offsets, table, bias)
    assert out.shape == (batch, output_dim), out.shape
    assert jnp.allclose(out, ref, atol=1e-5, rtol=1e-5), (
        float(jnp.max(jnp.abs(out - ref))))

    # output_dim > 1 path (bf16 MXU operands: ~3 decimal digits vs f32 ref).
    key, kt4, kb4 = jax.random.split(key, 3)
    table4 = 0.1 * jax.random.normal(kt4, (vocab, 4), jnp.float32)
    bias4 = 0.1 * jax.random.normal(kb4, (4,), jnp.float32)
    out4 = jax.block_until_ready(
        features_linear(idx, offsets, table4, bias4, block_b=128))
    ref4 = _reference(idx, offsets, table4, bias4)
    assert out4.shape == (batch, 4), out4.shape
    assert jnp.allclose(out4, ref4, atol=1e-2, rtol=1e-2), (
        float(jnp.max(jnp.abs(out4 - ref4))))

    print("KERNEL_OK")
</pallas_src>

<mosaic_0001>
module attributes {stable_mosaic.version = 11 : i64} {
  func.func @_features_linear_kernel(%arg0: i32, %arg1: memref<4x128xi32, #tpu.memory_space<vmem>>, %arg2: memref<21x1xf32, #tpu.memory_space<vmem>>, %arg3: memref<1x1xf32, #tpu.memory_space<vmem>>, %arg4: memref<1x128xf32, #tpu.memory_space<vmem>>) attributes {dimension_semantics = [#tpu.dimension_semantics<parallel>], iteration_bounds = array<i64: 2>, scalar_prefetch = 0 : i64, scratch_operands = 0 : i64, tpu.core_type = #tpu.core_type<tc>, window_params = [{transform_indices = @transform_0, window_bounds = array<i64: 4, 128>}, {pipeline_mode = #tpu.pipeline_mode<synchronous>, transform_indices = @transform_1, window_bounds = array<i64: 21, 1>}, {pipeline_mode = #tpu.pipeline_mode<synchronous>, transform_indices = @transform_2, window_bounds = array<i64: 1, 1>}, {transform_indices = @transform_3, window_bounds = array<i64: 1, 128>}]} {
    %c0 = arith.constant 0 : index
    %c0_0 = arith.constant 0 : index
    %0 = vector.load %arg1[%c0, %c0_0] : memref<4x128xi32, #tpu.memory_space<vmem>>, vector<4x128xi32>
    %1 = tpu.iota {dimensions = array<i32: 0>} : vector<21x128xi32>
    %cst = arith.constant 0.000000e+00 : f32
    %2 = vector.broadcast %cst : f32 to vector<21x128xf32>
    %3 = vector.extract_strided_slice %0 {offsets = [0, 0], sizes = [1, 128], strides = [1, 1]} : vector<4x128xi32> to vector<1x128xi32>
    %4 = vector.broadcast %3 : vector<1x128xi32> to vector<21x128xi32>
    %5 = arith.cmpi eq, %1, %4 : vector<21x128xi32>
    %6 = arith.extui %5 : vector<21x128xi1> to vector<21x128xi32>
    %7 = arith.sitofp %6 : vector<21x128xi32> to vector<21x128xf32>
    %8 = arith.addf %2, %7 : vector<21x128xf32>
    %9 = vector.extract_strided_slice %0 {offsets = [1, 0], sizes = [1, 128], strides = [1, 1]} : vector<4x128xi32> to vector<1x128xi32>
    %10 = vector.broadcast %9 : vector<1x128xi32> to vector<21x128xi32>
    %11 = arith.cmpi eq, %1, %10 : vector<21x128xi32>
    %12 = arith.extui %11 : vector<21x128xi1> to vector<21x128xi32>
    %13 = arith.sitofp %12 : vector<21x128xi32> to vector<21x128xf32>
    %14 = arith.addf %8, %13 : vector<21x128xf32>
    %15 = vector.extract_strided_slice %0 {offsets = [2, 0], sizes = [1, 128], strides = [1, 1]} : vector<4x128xi32> to vector<1x128xi32>
    %16 = vector.broadcast %15 : vector<1x128xi32> to vector<21x128xi32>
    %17 = arith.cmpi eq, %1, %16 : vector<21x128xi32>
    %18 = arith.extui %17 : vector<21x128xi1> to vector<21x128xi32>
    %19 = arith.sitofp %18 : vector<21x128xi32> to vector<21x128xf32>
    %20 = arith.addf %14, %19 : vector<21x128xf32>
    %21 = vector.extract_strided_slice %0 {offsets = [3, 0], sizes = [1, 128], strides = [1, 1]} : vector<4x128xi32> to vector<1x128xi32>
    %22 = vector.broadcast %21 : vector<1x128xi32> to vector<21x128xi32>
    %23 = arith.cmpi eq, %1, %22 : vector<21x128xi32>
    %24 = arith.extui %23 : vector<21x128xi1> to vector<21x128xi32>
    %25 = arith.sitofp %24 : vector<21x128xi32> to vector<21x128xf32>
    %26 = arith.addf %20, %25 : vector<21x128xf32>
    %c0_1 = arith.constant 0 : index
    %c0_2 = arith.constant 0 : index
    %27 = vector.load %arg2[%c0_1, %c0_2] : memref<21x1xf32, #tpu.memory_space<vmem>>, vector<21x1xf32>
    %28 = vector.broadcast %27 : vector<21x1xf32> to vector<21x128xf32>
    %29 = arith.mulf %26, %28 : vector<21x128xf32>
    %cst_3 = arith.constant dense<0.000000e+00> : vector<128xf32>
    %30 = vector.multi_reduction <add>, %29, %cst_3 [0] : vector<21x128xf32> to vector<128xf32>
    %31 = vector.shape_cast %30 : vector<128xf32> to vector<1x128xf32>
    %c0_4 = arith.constant 0 : index
    %c0_5 = arith.constant 0 : index
    %32 = vector.load %arg3[%c0_4, %c0_5] : memref<1x1xf32, #tpu.memory_space<vmem>>, vector<1x1xf32>
    %33 = vector.broadcast %32 : vector<1x1xf32> to vector<1x128xf32>
    %34 = arith.addf %31, %33 : vector<1x128xf32>
    %c0_6 = arith.constant 0 : index
    %c0_7 = arith.constant 0 : index
    %35 = vector.load %arg4[%c0_6, %c0_7] : memref<1x128xf32, #tpu.memory_space<vmem>>, vector<1x128xf32>
    tpu.vector_store %arg4[%c0_6, %c0_7], %34 {strides = array<i32>} : memref<1x128xf32, #tpu.memory_space<vmem>>, vector<1x128xf32>,
    return
  }
  func.func @transform_0(%arg0: i32) -> (i32, i32) {
    %c0_i32 = arith.constant 0 : i32
    %c0_i32_0 = arith.constant 0 : i32
    return %c0_i32, %arg0 : i32, i32
  }
  func.func @transform_1(%arg0: i32) -> (i32, i32) {
    %c0_i32 = arith.constant 0 : i32
    %c0_i32_0 = arith.constant 0 : i32
    %c0_i32_1 = arith.constant 0 : i32
    return %c0_i32, %c0_i32_0 : i32, i32
  }
  func.func @transform_2(%arg0: i32) -> (i32, i32) {
    %c0_i32 = arith.constant 0 : i32
    %c0_i32_0 = arith.constant 0 : i32
    %c0_i32_1 = arith.constant 0 : i32
    return %c0_i32, %c0_i32_0 : i32, i32
  }
  func.func @transform_3(%arg0: i32) -> (i32, i32) {
    %c0_i32 = arith.constant 0 : i32
    %c0_i32_0 = arith.constant 0 : i32
    return %c0_i32, %arg0 : i32, i32
  }
}

</mosaic_0001>

<llo_original>
// kernel: features_linear.1
$region0: #{features_linear.1}
  #allocation0 [shape = 'u32[]', space=smem, size = 0x4, offset = 0x4, fixed_abs, tag = 'smem constant byte address 0x4 - core index']
  #allocation1 [shape = 'u32[144,128]{1,0:T(1,128)}', space=vmem, size = 0x12000, scoped, tag = 'internal scratch']
  #allocation2 [shape = 'f32[1,1]{1,0:T(1,128)S(1)}', space=vmem, size = 0x200, scoped, tag = 'scoped memory for features_linear.1']
  %s0 = inlined_call_operand.vmem [shape: s32[4,256], index: 0, kind: input, shape index: {}]
  %s1 = inlined_call_operand.vmem [shape: f32[21,1], index: 1, kind: input, shape index: {}]
  %s2 = inlined_call_operand.<no memory space> [shape: f32[1,1], index: 2, kind: input, shape index: {}]
  %s3 = inlined_call_operand.vmem [shape: f32[1,256], index: 3, kind: output, shape index: {}]
  %s4 = sld [smem:[#allocation0]]
  $region45: #{features_linear.1} parent=0
    _
  %s6 = ssub.s32 1, %s4
  %s7 = scalar_select 0, %s6, %s4
  %v8 = vstv %s2
  %9 = vst [vmem:[#allocation2] sm:$0x1] %v8
  loop: start=0, step=1, limit=4
  $region2: #{features_linear.1} parent=0 // loop_pre_header
    _
  $region3: #{features_linear.1} parent=0 // loop_header
    %s11 = sphi 0, %s15
    %p12 = scmp.ge.s32.totalorder %s11, 4
    %s21 = sphi 0, %s23
    %s24 = sphi 0, %s21
    %s25 = sphi 0, %s24
    %s41 = sphi 0, %s25
    %s45 = sphi 0, %s45
    %s47 = sphi 0, %s45
    %s48 = sphi 0, %s47
    %s62 = sphi 0, %s48
    %s66 = sphi 0, %s66
    %s68 = sphi 0, %s66
    %s69 = sphi 0, %s68
    %s83 = sphi 0, %s69
    %s89 = sphi 0, %s91
    %s92 = sphi 0, %s89
    %s93 = sphi 0, %s92
    %s109 = sphi 0, %s93
  $region4: #{features_linear.1} parent=0 // loop_header_branch
    %14 = sbr.rel (%p12) target = $region8
  $region5: #{features_linear.1} parent=0 // loop_body
    %s16 = ssub.s32 %s11, 1
    %s17 = ssub.s32 %s11, 2
    %s18 = sadd.s32 %s11, 1
    %s19 = ssub.s32 %s11, %s18
    %p20 = scmp.eq.s32.totalorder %s19, 0
    %s22 = sadd.s32 %s21, 1
    %s23 = scalar_select %p20, %s21, %s22
    %p26 = pneg %p20
    %p27 = scmp.eq.s32.totalorder %s11, 1
    %p28 = por %p26, %p27
    %p29 = scmp.ne.s32.totalorder %s21, %s24
    %p30 = scmp.eq.s32.totalorder %s11, 0
    %p31 = por %p29, %p30
    %p32 = scmp.ne.s32.totalorder %s21, %s24
    %p33 = scmp.eq.s32.totalorder %s16, 1
    %p34 = por %p32, %p33
    %p35 = scmp.ne.s32.totalorder %s24, %s25
    %p36 = scmp.eq.s32.totalorder %s16, 0
    %p37 = por %p35, %p36
    %p38 = scmp.ne.s32.totalorder %s24, %s25
    %p39 = scmp.eq.s32.totalorder %s17, 1
    %p40 = por %p38, %p39
    %p42 = scmp.ne.s32.totalorder %s25, %s41
    %p43 = scmp.eq.s32.totalorder %s17, 0
    %p44 = por %p42, %p43
    %s46 = sadd.s32 %s45, 1
    %p49 = scmp.eq.s32.totalorder %s11, 1
    %p50 = scmp.ne.s32.totalorder %s45, %s47
    %p51 = scmp.eq.s32.totalorder %s11, 0
    %p52 = por %p50, %p51
    %p53 = scmp.ne.s32.totalorder %s45, %s47
    %p54 = scmp.eq.s32.totalorder %s16, 1
    %p55 = por %p53, %p54
    %p56 = scmp.ne.s32.totalorder %s47, %s48
    %p57 = scmp.eq.s32.totalorder %s16, 0
    %p58 = por %p56, %p57
    %p59 = scmp.ne.s32.totalorder %s47, %s48
    %p60 = scmp.eq.s32.totalorder %s17, 1
    %p61 = por %p59, %p60
    %p63 = scmp.ne.s32.totalorder %s48, %s62
    %p64 = scmp.eq.s32.totalorder %s17, 0
    %p65 = por %p63, %p64
    %s67 = sadd.s32 %s66, 1
    %p70 = scmp.eq.s32.totalorder %s11, 1
    %p71 = scmp.ne.s32.totalorder %s66, %s68
    %p72 = scmp.eq.s32.totalorder %s11, 0
    %p73 = por %p71, %p72
    %p74 = scmp.ne.s32.totalorder %s66, %s68
    %p75 = scmp.eq.s32.totalorder %s16, 1
    %p76 = por %p74, %p75
    %p77 = scmp.ne.s32.totalorder %s68, %s69
    %p78 = scmp.eq.s32.totalorder %s16, 0
    %p79 = por %p77, %p78
    %p80 = scmp.ne.s32.totalorder %s68, %s69
    %p81 = scmp.eq.s32.totalorder %s17, 1
    %p82 = por %p80, %p81
    %p84 = scmp.ne.s32.totalorder %s69, %s83
    %p85 = scmp.eq.s32.totalorder %s17, 0
    %p86 = por %p84, %p85
    %s87 = ssub.s32 %s11, %s18
    %p88 = scmp.eq.s32.totalorder %s87, 0
    %s90 = sadd.s32 %s89, 1
    %s91 = scalar_select %p88, %s89, %s90
    %p94 = pneg %p88
    %p95 = scmp.eq.s32.totalorder %s11, 1
    %p96 = por %p94, %p95
    %p97 = scmp.ne.s32.totalorder %s89, %s92
    %p98 = scmp.eq.s32.totalorder %s11, 0
    %p99 = por %p97, %p98
    %p100 = scmp.ne.s32.totalorder %s89, %s92
    %p101 = scmp.eq.s32.totalorder %s16, 1
    %p102 = por %p100, %p101
    %p103 = scmp.ne.s32.totalorder %s92, %s93
    %p104 = scmp.eq.s32.totalorder %s16, 0
    %p105 = por %p103, %p104
    %p106 = scmp.ne.s32.totalorder %s92, %s93
    %p107 = scmp.eq.s32.totalorder %s17, 1
    %p108 = por %p106, %p107
    %p110 = scmp.ne.s32.totalorder %s93, %s109
    %p111 = scmp.eq.s32.totalorder %s17, 0
    %p112 = por %p110, %p111
    %p113 = scmp.le.s32.totalorder 1, %s11
    %p114 = scmp.lt.s32.totalorder %s11, 3
    %p115 = pnand %p113, %p114
    %p116 = pneg %p115
    // Predicated region
    $region9: #{features_linear.1} parent=5 // pred_check
      _
    $region10: #{features_linear.1} parent=5 // pred_check_branch
      %118 = sbr.rel (%p115) target = $region12
    $region11: #{features_linear.1} parent=5 // pred_region
      %s119 = ssub.s32 %s11, 1
      // Predicated region
      $region13: #{features_linear.1} parent=11 // pred_check
        %p120 = pneg %p58
      $region14: #{features_linear.1} parent=11 // pred_check_branch
        %122 = sbr.rel (%p120) target = $region16
      $region15: #{features_linear.1} parent=11 // pred_region
        _
      $region16: #{features_linear.1} parent=11 // pred_fallthru
        _
      // Predicated region
      $region17: #{features_linear.1} parent=11 // pred_check
        %p123 = pneg %p79
      $region18: #{features_linear.1} parent=11 // pred_check_branch
        %125 = sbr.rel (%p123) target = $region20
      $region19: #{features_linear.1} parent=11 // pred_region
        _
      $region20: #{features_linear.1} parent=11 // pred_fallthru
        _
    $region12: #{features_linear.1} parent=5 // pred_fallthru
      _
    %p126 = scmp.lt.s32.totalorder %s11, 2
    // Predicated region
    $region21: #{features_linear.1} parent=5 // pred_check
      %p127 = pneg %p126
    $region22: #{features_linear.1} parent=5 // pred_check_branch
      %129 = sbr.rel (%p127) target = $region24
    $region23: #{features_linear.1} parent=5 // pred_region
      // Predicated region
      $region25: #{features_linear.1} parent=23 // pred_check
        %p130 = pneg %p31
      $region26: #{features_linear.1} parent=23 // pred_check_branch
        %132 = sbr.rel (%p130) target = $region28
      $region27: #{features_linear.1} parent=23 // pred_region
        %p133 = scmp.lt.s32.totalorder %s11, 1
        %s134 = scalar_select %p133, %s11, 1
        %s135 = smul.addr %s134, 4
        %s136 = scalar_lea.vmem %s0, %s135
      $region28: #{features_linear.1} parent=23 // pred_fallthru
        _
    $region24: #{features_linear.1} parent=5 // pred_fallthru
      _
    %p137 = scmp.le.s32.totalorder 1, %s11
    %p138 = scmp.lt.s32.totalorder %s11, 3
    %p139 = pnand %p137, %p138
    %p140 = pneg %p139
    // Predicated region
    $region29: #{features_linear.1} parent=5 // pred_check
      _
    $region30: #{features_linear.1} parent=5 // pred_check_branch
      %142 = sbr.rel (%p139) target = $region32
    $region31: #{features_linear.1} parent=5 // pred_region
      %s143 = ssub.s32 %s11, 1
      %p144 = scmp.lt.s32.totalorder %s16, 1
      %s145 = scalar_select %p144, %s16, 1
      %s146 = smul.addr %s145, 4
      %s147 = scalar_lea.vmem %s0, %s146
      %p148 = pneg %p37
      %p149 = pneg %p34
      %p150 = pneg %p58
      %p151 = pneg %p55
      %p152 = pneg %p79
      %p153 = pneg %p76
      %p154 = pneg %p105
      %p155 = pneg %p102
      %p156 = scmp.lt.s32.totalorder %s16, 1
      %s157 = scalar_select %p156, %s16, 1
      %s158 = scalar_lea.vmem %s3, %s157
      %p159 = scmp.lt.s32.totalorder %s16, 1
      %s160 = scalar_select %p159, %s16, 1
      %s161 = smul.addr %s160, 4
      %s162 = scalar_lea.vmem %s0, %s161
      %p163 = scmp.lt.s32.totalorder %s16, 1
      %s164 = scalar_select %p163, %s16, 1
      %s165 = scalar_lea.vmem %s3, %s164
      %v166 = vld [vmem:[%s162] sm:$0xf]
      %v167 = vlaneseq
      %v168 = vshrl.u32 %v167, 7
      %v169 = vadd.s32 %v168, 8
      %v170 = vadd.s32 %v168, 16
      %v171 = vlaneseq
      %v172 = vshrl.u32 %v171, 7
      %v173 = vsub.s32 0, %v172
      %v174 = vrot.slane %v166, %v173
      %vm175 = vcmp.eq.s32.totalorder %v168, %v174
      %vm176 = vcmp.eq.s32.totalorder %v169, %v174
      %vm177 = vcmp.eq.s32.totalorder %v170, %v174
      %v178 = vsel %vm175, 1, 0
      %v179 = vsel %vm176, 1, 0
      %v180 = vsel %vm177, 1, 0
      %v181 = vcvt.s32.f32 %v178
      %v182 = vcvt.s32.f32 %v179
      %v183 = vcvt.s32.f32 %v180
      %v184 = vadd.f32 %v181, 0.0
      %v185 = vadd.f32 %v182, 0.0
      %v186 = vadd.f32 %v183, 0.0
      %v187 = vlaneseq
      %v188 = vshrl.u32 %v187, 7
      %v189 = vsub.s32 1, %v188
      %v190 = vrot.slane %v166, %v189
      %vm191 = vcmp.eq.s32.totalorder %v168, %v190
      %vm192 = vcmp.eq.s32.totalorder %v169, %v190
      %vm193 = vcmp.eq.s32.totalorder %v170, %v190
      %v194 = vsel %vm191, 1, 0
      %v195 = vsel %vm192, 1, 0
      %v196 = vsel %vm193, 1, 0
      %v197 = vcvt.s32.f32 %v194
      %v198 = vcvt.s32.f32 %v195
      %v199 = vcvt.s32.f32 %v196
      %v200 = vadd.f32 %v184, %v197
      %v201 = vadd.f32 %v185, %v198
      %v202 = vadd.f32 %v186, %v199
      %v203 = vlaneseq
      %v204 = vshrl.u32 %v203, 7
      %v205 = vsub.s32 2, %v204
      %v206 = vrot.slane %v166, %v205
      %vm207 = vcmp.eq.s32.totalorder %v168, %v206
      %vm208 = vcmp.eq.s32.totalorder %v169, %v206
      %vm209 = vcmp.eq.s32.totalorder %v170, %v206
      %v210 = vsel %vm207, 1, 0
      %v211 = vsel %vm208, 1, 0
      %v212 = vsel %vm209, 1, 0
      %v213 = vcvt.s32.f32 %v210
      %v214 = vcvt.s32.f32 %v211
      %v215 = vcvt.s32.f32 %v212
      %v216 = vadd.f32 %v200, %v213
      %v217 = vadd.f32 %v201, %v214
      %v218 = vadd.f32 %v202, %v215
      %v219 = vlaneseq
      %v220 = vshrl.u32 %v219, 7
      %v221 = vsub.s32 3, %v220
      %v222 = vrot.slane %v166, %v221
      %vm223 = vcmp.eq.s32.totalorder %v168, %v222
      %vm224 = vcmp.eq.s32.totalorder %v169, %v222
      %vm225 = vcmp.eq.s32.totalorder %v170, %v222
      %v226 = vsel %vm223, 1, 0
      %v227 = vsel %vm224, 1, 0
      %v228 = vsel %vm225, 1, 0
      %v229 = vcvt.s32.f32 %v226
      %v230 = vcvt.s32.f32 %v227
      %v231 = vcvt.s32.f32 %v228
      %v232 = vadd.f32 %v216, %v229
      %v233 = vadd.f32 %v217, %v230
      %v234 = vadd.f32 %v218, %v231
      %v235 = vld [vmem:[%s1] sm:$0xff]
      %v236 = vld [vmem:[%s1 + $0x8] sm:$0xff]
      %v237 = vld [vmem:[%s1 + $0x10] sm:$0x1f]
      %239 = vset.pattern.permute.xlu0 0
      %240 = vperm.xlu0 %239, %v235
      %v241 = vpop.permute.xlu0 %240
      %244 = vset.pattern.permute.xlu0 0
      %245 = vperm.xlu0 %244, %v236
      %v246 = vpop.permute.xlu0 %245
      %249 = vset.pattern.permute.xlu0 0
      %250 = vperm.xlu0 %249, %v237
      %v251 = vpop.permute.xlu0 %250
      %v253 = vmul.f32 %v232, %v241
      %v254 = vmul.f32 %v233, %v246
      %v255 = vmul.f32 %v234, %v251
      %v256 = vadd.f32 %v253, %v254
      %vm257 = vcmask 1044480
      %v258 = vsel %vm257, %v255, 0.0
      %v259 = vadd.f32 %v256, %v258
      %v260 = vrot.slane %v259, 4
      %v261 = vadd.f32 %v259, %v260
      %v262 = vrot.slane %v261, 2
      %v263 = vadd.f32 %v261, %v262
      %v264 = vrot.slane %v263, 1
      %v265 = vadd.f32 %v263, %v264
      %v266 = vld [vmem:[#allocation2] sm:$0x1]
      %268 = vset.pattern.permute.xlu0 0
      %269 = vperm.xlu0 %268, %v266
      %v270 = vpop.permute.xlu0 %269
      %v272 = vlaneseq
      %v273 = vshrl.u32 %v272, 7
      %v274 = vsub.s32 0, %v273
      %v275 = vrot.slane %v270, %v274
      %v276 = vadd.f32 %v265, %v275
      %277 = vst [vmem:[%s165] sm:$0x1] %v276
      %p278 = scmp.lt.s32.totalorder %s16, 1
      %s279 = scalar_select %p278, %s16, 1
      %s280 = scalar_lea.vmem %s3, %s279
      // Predicated region
      $region33: #{features_linear.1} parent=31 // pred_check
        %p281 = pneg %p102
      $region34: #{features_linear.1} parent=31 // pred_check_branch
        %283 = sbr.rel (%p281) target = $region36
      $region35: #{features_linear.1} parent=31 // pred_region
        _
      $region36: #{features_linear.1} parent=31 // pred_fallthru
        _
    $region32: #{features_linear.1} parent=5 // pred_fallthru
      _
    %p284 = scmp.le.s32.totalorder 2, %s11
    // Predicated region
    $region37: #{features_linear.1} parent=5 // pred_check
      %p285 = pneg %p284
    $region38: #{features_linear.1} parent=5 // pred_check_branch
      %287 = sbr.rel (%p285) target = $region40
    $region39: #{features_linear.1} parent=5 // pred_region
      %s288 = ssub.s32 %s11, 2
      // Predicated region
      $region41: #{features_linear.1} parent=39 // pred_check
        %p289 = pneg %p108
      $region42: #{features_linear.1} parent=39 // pred_check_branch
        %291 = sbr.rel (%p289) target = $region44
      $region43: #{features_linear.1} parent=39 // pred_region
        %p292 = scmp.lt.s32.totalorder %s17, 1
        %s293 = scalar_select %p292, %s17, 1
        %s294 = scalar_lea.vmem %s3, %s293
      $region44: #{features_linear.1} parent=39 // pred_fallthru
        _
    $region40: #{features_linear.1} parent=5 // pred_fallthru
      _
  $region6: #{features_linear.1} parent=0 // loop_footer
    %s15 = sadd.s32 1, %s11
  $region7: #{features_linear.1} parent=0 // loop_footer_branch
    %10 = sbr.rel target = $region3
  $region8: #{features_linear.1} parent=0 // loop_exit
    _

</llo_original>
